<compile_context>
chip_gen: v7x
topology: tpu7x:2x2x1
jax: 0.10.0
libtpu: 0.0.40
codegen_flags: <defaults>
</compile_context>

<pallas_src>
import functools

import jax
import jax.numpy as jnp
from jax.experimental import pallas as pl
from jax.experimental.pallas import tpu as pltpu


LANES = 512          # lane width of a tile (multiple of 128)
BLOCK_ROWS = 512     # sublane rows per tile (multiple of 8) -> 1 MiB f32 per buffer


def _mape_kernel(f_ref, t_ref, w_ref, sum_ref, cnt_ref, *, eps):
    """One (block_rows, LANES) tile: accumulate masked row-sums and row-counts."""
    s = pl.program_id(1)

    @pl.when(s == 0)
    def _init():
        sum_ref[...] = jnp.zeros_like(sum_ref)
        cnt_ref[...] = jnp.zeros_like(cnt_ref)

    f = f_ref[...]
    t = t_ref[...]
    if f.dtype != jnp.float32:
        f = f.astype(jnp.float32)
    if t.dtype != jnp.float32:
        t = t.astype(jnp.float32)

    # weights may be f32 / bf16 / int8 / bool; compare against 1 in-kernel so the
    # caller can stream a narrow mask dtype and cut HBM traffic.
    mask = w_ref[...] == 1

    # Only selected elements are ever divided (matches torch boolean indexing).
    denom = jnp.where(mask, t + eps, 1.0)
    ratio = jnp.abs((f - t + eps) * pl.reciprocal(denom, approx=False))
    vals = jnp.where(mask, ratio, 0.0)
    sel = mask.astype(jnp.float32)

    # Lane-wise reduction only; cross-row / cross-core collapse is deferred to the
    # wrapper so the per-tile loop stays cheap.
    sum_ref[...] += jnp.sum(vals, axis=-1, keepdims=True)
    cnt_ref[...] += jnp.sum(sel, axis=-1, keepdims=True)


def mape_loss(forecast, target, weights, eps=1e-8):
    """Pallas TPU MAPE loss. forecast/target/weights: same shape. Returns f32 scalar."""
    assert forecast.shape == target.shape == weights.shape
    n = forecast.size

    f = forecast.reshape(-1)
    t = target.reshape(-1)
    w = weights.reshape(-1)

    # Tile geometry: shrink the row-block for tiny inputs, keep (8, 128) multiples.
    rows_needed = -(-n // LANES)
    block_rows = min(BLOCK_ROWS, max(8, -(-rows_needed // 8) * 8))
    tile_elems = block_rows * LANES

    padded = -(-n // tile_elems) * tile_elems
    if padded != n:
        pad = padded - n
        f = jnp.pad(f, (0, pad))
        t = jnp.pad(t, (0, pad))
        w = jnp.pad(w, (0, pad))      # padded weight = 0 -> excluded from the mean

    rows = padded // LANES
    f = f.reshape(rows, LANES)
    t = t.reshape(rows, LANES)
    w = w.reshape(rows, LANES)

    num_blocks = rows // block_rows
    # Leading "parallel" axis: 2 row-groups when possible so v7x's two TensorCores
    # each stream half the data into their own partial accumulators.  On 1-TC chips
    # (v5e/v6e) the extra group just runs serially at negligible cost.
    n_par = 2 if (num_blocks >= 2 and num_blocks % 2 == 0) else 1
    n_seq = num_blocks // n_par

    in_spec = pl.BlockSpec((block_rows, LANES), lambda p, s: (p * n_seq + s, 0))
    out_spec = pl.BlockSpec((block_rows, 1), lambda p, s: (p, 0))

    kernel = functools.partial(_mape_kernel, eps=float(eps))  # plain Python float,
    # so it lowers as a literal and is not captured as a jaxpr constant.

    psum, pcnt = pl.pallas_call(
        kernel,
        out_shape=(
            jax.ShapeDtypeStruct((n_par * block_rows, 1), jnp.float32),
            jax.ShapeDtypeStruct((n_par * block_rows, 1), jnp.float32),
        ),
        grid_spec=pltpu.PrefetchScalarGridSpec(
            num_scalar_prefetch=0,
            grid=(n_par, n_seq),
            in_specs=[in_spec, in_spec, in_spec],
            out_specs=(out_spec, out_spec),
        ),
        compiler_params=pltpu.CompilerParams(
            dimension_semantics=("parallel", "arbitrary"),
            vmem_limit_bytes=32 * 1024 * 1024,
        ),
    )(f, t, w)

    # Final cross-row / cross-core collapse and the single scalar divide.
    # Empty selection -> 0/0 -> NaN, same as torch.mean over an empty tensor.
    return jnp.sum(psum) / jnp.sum(pcnt)


def _reference(forecast, target, weights, eps=1e-8):
    """Pure-JAX reference with the same masked formulation as the torch module."""
    mask = weights == 1
    denom = jnp.where(mask, target + eps, 1.0)
    vals = jnp.where(mask, jnp.abs((forecast - target + eps) / denom), 0.0)
    return jnp.sum(vals) / jnp.sum(mask.astype(jnp.float32))


if __name__ == "__main__":
    key = jax.random.PRNGKey(0)
    kf, kt, kw = jax.random.split(key, 3)

    B, T = 4, 16  # (batch, time) as in the PyTorch module
    forecast = jax.random.normal(kf, (B, T), dtype=jnp.float32)
    target = jax.random.normal(kt, (B, T), dtype=jnp.float32) + 2.0
    # 0/1 mask with at least one selected element
    weights = (jax.random.uniform(kw, (B, T)) > 0.3).astype(jnp.float32)
    weights = weights.at[0, 0].set(1.0)

    loss = mape_loss(forecast, target, weights)
    loss = jax.block_until_ready(loss)

    ref = _reference(forecast, target, weights)
    assert jnp.allclose(loss, ref, rtol=1e-5, atol=1e-6), (loss, ref)

    print("KERNEL_OK")
</pallas_src>

<mosaic_0001>
module attributes {stable_mosaic.version = 11 : i64} {
  func.func @_mape_kernel(%arg0: i32, %arg1: i32, %arg2: memref<8x512xf32, #tpu.memory_space<vmem>>, %arg3: memref<8x512xf32, #tpu.memory_space<vmem>>, %arg4: memref<8x512xf32, #tpu.memory_space<vmem>>, %arg5: memref<8x1xf32, #tpu.memory_space<vmem>>, %arg6: memref<8x1xf32, #tpu.memory_space<vmem>>) attributes {dimension_semantics = [#tpu.dimension_semantics<parallel>, #tpu.dimension_semantics<arbitrary>], iteration_bounds = array<i64: 1, 1>, scalar_prefetch = 0 : i64, scratch_operands = 0 : i64, tpu.core_type = #tpu.core_type<tc>, window_params = [{transform_indices = @transform_0, window_bounds = array<i64: 8, 512>}, {transform_indices = @transform_1, window_bounds = array<i64: 8, 512>}, {transform_indices = @transform_2, window_bounds = array<i64: 8, 512>}, {transform_indices = @transform_3, window_bounds = array<i64: 8, 1>}, {transform_indices = @transform_4, window_bounds = array<i64: 8, 1>}]} {
    %c0_i32 = arith.constant 0 : i32
    %0 = arith.cmpi eq, %arg1, %c0_i32 : i32
    %1 = arith.extui %0 : i1 to i32
    %c0_i32_0 = arith.constant 0 : i32
    %2 = arith.cmpi ne, %1, %c0_i32_0 : i32
    scf.if %2 {
      %cst_20 = arith.constant 0.000000e+00 : f32
      %32 = vector.broadcast %cst_20 : f32 to vector<8x1xf32>
      %c0_21 = arith.constant 0 : index
      %c0_22 = arith.constant 0 : index
      %33 = vector.load %arg5[%c0_21, %c0_22] : memref<8x1xf32, #tpu.memory_space<vmem>>, vector<8x1xf32>
      tpu.vector_store %arg5[%c0_21, %c0_22], %32 {strides = array<i32>} : memref<8x1xf32, #tpu.memory_space<vmem>>, vector<8x1xf32>,
      %cst_23 = arith.constant 0.000000e+00 : f32
      %34 = vector.broadcast %cst_23 : f32 to vector<8x1xf32>
      %c0_24 = arith.constant 0 : index
      %c0_25 = arith.constant 0 : index
      %35 = vector.load %arg6[%c0_24, %c0_25] : memref<8x1xf32, #tpu.memory_space<vmem>>, vector<8x1xf32>
      tpu.vector_store %arg6[%c0_24, %c0_25], %34 {strides = array<i32>} : memref<8x1xf32, #tpu.memory_space<vmem>>, vector<8x1xf32>,
    } else {
    }
    %c0 = arith.constant 0 : index
    %c0_1 = arith.constant 0 : index
    %3 = vector.load %arg2[%c0, %c0_1] : memref<8x512xf32, #tpu.memory_space<vmem>>, vector<8x512xf32>
    %c0_2 = arith.constant 0 : index
    %c0_3 = arith.constant 0 : index
    %4 = vector.load %arg3[%c0_2, %c0_3] : memref<8x512xf32, #tpu.memory_space<vmem>>, vector<8x512xf32>
    %c0_4 = arith.constant 0 : index
    %c0_5 = arith.constant 0 : index
    %5 = vector.load %arg4[%c0_4, %c0_5] : memref<8x512xf32, #tpu.memory_space<vmem>>, vector<8x512xf32>
    %cst = arith.constant 1.000000e+00 : f32
    %6 = vector.broadcast %cst : f32 to vector<8x512xf32>
    %7 = arith.cmpf oeq, %5, %6 : vector<8x512xf32>
    %cst_6 = arith.constant 9.99999993E-9 : f32
    %8 = vector.broadcast %cst_6 : f32 to vector<8x512xf32>
    %9 = arith.addf %4, %8 : vector<8x512xf32>
    %cst_7 = arith.constant 1.000000e+00 : f32
    %10 = vector.broadcast %cst_7 : f32 to vector<8x512xf32>
    %11 = arith.select %7, %9, %10 : vector<8x512xi1>, vector<8x512xf32>
    %12 = arith.subf %3, %4 : vector<8x512xf32>
    %cst_8 = arith.constant 9.99999993E-9 : f32
    %13 = vector.broadcast %cst_8 : f32 to vector<8x512xf32>
    %14 = arith.addf %12, %13 : vector<8x512xf32>
    %15 = tpu.reciprocal %11 : vector<8x512xf32> -> vector<8x512xf32>
    %16 = arith.mulf %14, %15 : vector<8x512xf32>
    %17 = math.absf %16 : vector<8x512xf32>
    %cst_9 = arith.constant 0.000000e+00 : f32
    %18 = vector.broadcast %cst_9 : f32 to vector<8x512xf32>
    %19 = arith.select %7, %17, %18 : vector<8x512xi1>, vector<8x512xf32>
    %20 = arith.extui %7 : vector<8x512xi1> to vector<8x512xi32>
    %21 = arith.sitofp %20 : vector<8x512xi32> to vector<8x512xf32>
    %c0_10 = arith.constant 0 : index
    %c0_11 = arith.constant 0 : index
    %22 = vector.load %arg5[%c0_10, %c0_11] : memref<8x1xf32, #tpu.memory_space<vmem>>, vector<8x1xf32>
    %cst_12 = arith.constant dense<0.000000e+00> : vector<8xf32>
    %23 = vector.multi_reduction <add>, %19, %cst_12 [1] : vector<8x512xf32> to vector<8xf32>
    %24 = vector.shape_cast %23 : vector<8xf32> to vector<8x1xf32>
    %25 = arith.addf %22, %24 : vector<8x1xf32>
    %c0_13 = arith.constant 0 : index
    %c0_14 = arith.constant 0 : index
    %26 = vector.load %arg5[%c0_13, %c0_14] : memref<8x1xf32, #tpu.memory_space<vmem>>, vector<8x1xf32>
    tpu.vector_store %arg5[%c0_13, %c0_14], %25 {strides = array<i32>} : memref<8x1xf32, #tpu.memory_space<vmem>>, vector<8x1xf32>,
    %c0_15 = arith.constant 0 : index
    %c0_16 = arith.constant 0 : index
    %27 = vector.load %arg6[%c0_15, %c0_16] : memref<8x1xf32, #tpu.memory_space<vmem>>, vector<8x1xf32>
    %cst_17 = arith.constant dense<0.000000e+00> : vector<8xf32>
    %28 = vector.multi_reduction <add>, %21, %cst_17 [1] : vector<8x512xf32> to vector<8xf32>
    %29 = vector.shape_cast %28 : vector<8xf32> to vector<8x1xf32>
    %30 = arith.addf %27, %29 : vector<8x1xf32>
    %c0_18 = arith.constant 0 : index
    %c0_19 = arith.constant 0 : index
    %31 = vector.load %arg6[%c0_18, %c0_19] : memref<8x1xf32, #tpu.memory_space<vmem>>, vector<8x1xf32>
    tpu.vector_store %arg6[%c0_18, %c0_19], %30 {strides = array<i32>} : memref<8x1xf32, #tpu.memory_space<vmem>>, vector<8x1xf32>,
    return
  }
  func.func @transform_0(%arg0: i32, %arg1: i32) -> (i32, i32) {
    %c1_i32 = arith.constant 1 : i32
    %0 = arith.muli %arg0, %c1_i32 : i32
    %1 = arith.addi %0, %arg1 : i32
    %c0_i32 = arith.constant 0 : i32
    %c0_i32_0 = arith.constant 0 : i32
    return %1, %c0_i32 : i32, i32
  }
  func.func @transform_1(%arg0: i32, %arg1: i32) -> (i32, i32) {
    %c1_i32 = arith.constant 1 : i32
    %0 = arith.muli %arg0, %c1_i32 : i32
    %1 = arith.addi %0, %arg1 : i32
    %c0_i32 = arith.constant 0 : i32
    %c0_i32_0 = arith.constant 0 : i32
    return %1, %c0_i32 : i32, i32
  }
  func.func @transform_2(%arg0: i32, %arg1: i32) -> (i32, i32) {
    %c1_i32 = arith.constant 1 : i32
    %0 = arith.muli %arg0, %c1_i32 : i32
    %1 = arith.addi %0, %arg1 : i32
    %c0_i32 = arith.constant 0 : i32
    %c0_i32_0 = arith.constant 0 : i32
    return %1, %c0_i32 : i32, i32
  }
  func.func @transform_3(%arg0: i32, %arg1: i32) -> (i32, i32) {
    %c0_i32 = arith.constant 0 : i32
    %c0_i32_0 = arith.constant 0 : i32
    return %arg0, %c0_i32 : i32, i32
  }
  func.func @transform_4(%arg0: i32, %arg1: i32) -> (i32, i32) {
    %c0_i32 = arith.constant 0 : i32
    %c0_i32_0 = arith.constant 0 : i32
    return %arg0, %c0_i32 : i32, i32
  }
}

</mosaic_0001>

<llo_original>
// kernel: tpu_custom_call.1
$region0: #{tpu_custom_call.1}
  #allocation0 [shape = 'u32[]', space=smem, size = 0x4, offset = 0x4, fixed_abs, tag = 'smem constant byte address 0x4 - core index']
  #allocation1 [shape = 'u32[144,128]{1,0:T(1,128)}', space=vmem, size = 0x12000, scoped, tag = 'internal scratch']
  %s0 = inlined_call_operand.hbm [shape: f32[8,512], index: 0, kind: input, shape index: {}]
  %s1 = inlined_call_operand.hbm [shape: f32[8,512], index: 1, kind: input, shape index: {}]
  %s2 = inlined_call_operand.hbm [shape: f32[8,512], index: 2, kind: input, shape index: {}]
  %s3 = inlined_call_operand.vmem [shape: f32[8,1], index: 3, kind: output, shape index: {0}]
  %s4 = inlined_call_operand.vmem [shape: f32[8,1], index: 4, kind: output, shape index: {1}]
  %5 = xla_tuple %s3, %s4
  %s6 = sld [smem:[#allocation0]]
  $region46: #{tpu_custom_call.1} parent=0
    _
  %s8 = ssub.s32 1, %s6
  %s9 = scalar_select 0, %s8, %s6
  $region1: #{tpu_custom_call.1} parent=0
    #allocation2 [shape = 'u8[16384]{0}', space=vmem, size = 0x4000, scoped, tag = 'input window, operand 0, single buffered']
    #allocation3 [shape = 's32[1]{0}', space=sflag, size = 0x4, scoped, tag = 'scoped memory for tpu_custom_call.1']
    #allocation4 [shape = 'u8[16384]{0}', space=vmem, size = 0x4000, scoped, tag = 'input window, operand 1, single buffered']
    #allocation5 [shape = 's32[1]{0}', space=sflag, size = 0x4, scoped, tag = 'scoped memory for tpu_custom_call.1']
    #allocation6 [shape = 'u8[16384]{0}', space=vmem, size = 0x4000, scoped, tag = 'input window, operand 2, single buffered']
    %10 = vsyncpa [#allocation3], 0
    %11 = vsyncpa [#allocation5], 0
    // Predicated region
    $region2: #{tpu_custom_call.1} parent=1 // pred_check
      _
    $region3: #{tpu_custom_call.1} parent=1 // pred_check_branch
      %13 = sbr.rel (0) target = $region5
    $region4: #{tpu_custom_call.1} parent=1 // pred_region
      %s14 = sadd.s32 0, 0
      %s16 = ssub.s32 512, 512
      %17 = vsyncadd [#allocation3], %s16
      %s18 = smul.addr %s14, 4
      %s19 = smul.addr %s18, 128
      %s20 = scalar_lea.hbm %s0, %s19
      %s22 = sshll.u32 [#allocation2], 4
      %s23 = int_to_ptr.vmem [resolvable:$true] %s22
      %25 = dma.hbm_to_vmem [thread:$0]  %s20, 512, %s23, [#allocation3]
    $region5: #{tpu_custom_call.1} parent=1 // pred_fallthru
      _
    // Predicated region
    $region6: #{tpu_custom_call.1} parent=1 // pred_check
      _
    $region7: #{tpu_custom_call.1} parent=1 // pred_check_branch
      %27 = sbr.rel (0) target = $region9
    $region8: #{tpu_custom_call.1} parent=1 // pred_region
      %s28 = sadd.s32 0, 0
      %s30 = ssub.s32 512, 512
      %31 = vsyncadd [#allocation5], %s30
      %s32 = smul.addr %s28, 4
      %s33 = smul.addr %s32, 128
      %s34 = scalar_lea.hbm %s1, %s33
      %s36 = sshll.u32 [#allocation4], 4
      %s37 = int_to_ptr.vmem [resolvable:$true] %s36
      %39 = dma.hbm_to_vmem [thread:$0]  %s34, 512, %s37, [#allocation5]
    $region9: #{tpu_custom_call.1} parent=1 // pred_fallthru
      _
    // Predicated region
    $region10: #{tpu_custom_call.1} parent=1 // pred_check
      _
    $region11: #{tpu_custom_call.1} parent=1 // pred_check_branch
      %41 = sbr.rel (0) target = $region13
    $region12: #{tpu_custom_call.1} parent=1 // pred_region
      %s42 = sadd.s32 0, 0
      %s44 = ssub.s32 512, 512
      %45 = vsyncadd [#allocation5], %s44
      %s46 = smul.addr %s42, 4
      %s47 = smul.addr %s46, 128
      %s48 = scalar_lea.hbm %s2, %s47
      %s50 = sshll.u32 [#allocation6], 4
      %s51 = int_to_ptr.vmem [resolvable:$true] %s50
      %53 = dma.hbm_to_vmem [thread:$0]  %s48, 512, %s51, [#allocation5]
    $region13: #{tpu_custom_call.1} parent=1 // pred_fallthru
      _
    // Predicated region
    $region14: #{tpu_custom_call.1} parent=1 // pred_check
      _
    $region15: #{tpu_custom_call.1} parent=1 // pred_check_branch
      %55 = sbr.rel (0) target = $region17
    $region16: #{tpu_custom_call.1} parent=1 // pred_region
      %56 = dma.done [#allocation3], 512
    $region17: #{tpu_custom_call.1} parent=1 // pred_fallthru
      _
    // Predicated region
    $region18: #{tpu_custom_call.1} parent=1 // pred_check
      _
    $region19: #{tpu_custom_call.1} parent=1 // pred_check_branch
      %58 = sbr.rel (0) target = $region21
    $region20: #{tpu_custom_call.1} parent=1 // pred_region
      %59 = dma.done [#allocation5], 512
    $region21: #{tpu_custom_call.1} parent=1 // pred_fallthru
      _
    // Predicated region
    $region22: #{tpu_custom_call.1} parent=1 // pred_check
      _
    $region23: #{tpu_custom_call.1} parent=1 // pred_check_branch
      %61 = sbr.rel (0) target = $region25
    $region24: #{tpu_custom_call.1} parent=1 // pred_region
      %62 = dma.done [#allocation5], 512
    $region25: #{tpu_custom_call.1} parent=1 // pred_fallthru
      _
    %s63 = sadd.s32 0, 0
    %s64 = sadd.s32 0, 0
    %s65 = sadd.s32 0, 0
    %p66 = scmp.eq.s32.totalorder 0, 0
    // Predicated region
    $region26: #{tpu_custom_call.1} parent=1 // pred_check
      %p67 = pneg %p66
    $region27: #{tpu_custom_call.1} parent=1 // pred_check_branch
      %69 = sbr.rel (%p67) target = $region29
    $region28: #{tpu_custom_call.1} parent=1 // pred_region
      %vm70 = vcmask 7168
      %71 = vst.msk [vmem:[%s3] sm:$0xff] %vm70, 0.0
      %72 = vst.msk [vmem:[%s4] sm:$0xff] %vm70, 0.0
    $region29: #{tpu_custom_call.1} parent=1 // pred_fallthru
      _
    %v73 = vld [vmem:[#allocation2] sm:$0xff]
    %v74 = vld [vmem:[#allocation2 + $0x8] sm:$0xff]
    %v75 = vld [vmem:[#allocation2 + $0x10] sm:$0xff]
    %v76 = vld [vmem:[#allocation2 + $0x18] sm:$0xff]
    %v77 = vld [vmem:[#allocation4] sm:$0xff]
    %v78 = vld [vmem:[#allocation4 + $0x8] sm:$0xff]
    %v79 = vld [vmem:[#allocation4 + $0x10] sm:$0xff]
    %v80 = vld [vmem:[#allocation4 + $0x18] sm:$0xff]
    %v81 = vld [vmem:[#allocation6] sm:$0xff]
    %v82 = vld [vmem:[#allocation6 + $0x8] sm:$0xff]
    %v83 = vld [vmem:[#allocation6 + $0x10] sm:$0xff]
    %v84 = vld [vmem:[#allocation6 + $0x18] sm:$0xff]
    %vm85 = vcmp.eq.f32.partialorder %v81, 1.0
    %vm86 = vcmp.eq.f32.partialorder %v82, 1.0
    %vm87 = vcmp.eq.f32.partialorder %v83, 1.0
    %vm88 = vcmp.eq.f32.partialorder %v84, 1.0
    %v89 = vadd.f32 %v77, 1e-08
    %v90 = vadd.f32 %v78, 1e-08
    %v91 = vadd.f32 %v79, 1e-08
    %v92 = vadd.f32 %v80, 1e-08
    %v93 = vsel %vm85, %v89, 1.0
    %v94 = vsel %vm86, %v90, 1.0
    %v95 = vsel %vm87, %v91, 1.0
    %v96 = vsel %vm88, %v92, 1.0
    %v97 = vsub.f32 %v73, %v77
    %v98 = vsub.f32 %v74, %v78
    %v99 = vsub.f32 %v75, %v79
    %v100 = vsub.f32 %v76, %v80
    %v101 = vadd.f32 %v97, 1e-08
    %v102 = vadd.f32 %v98, 1e-08
    %v103 = vadd.f32 %v99, 1e-08
    %v104 = vadd.f32 %v100, 1e-08
    %v105 = vrcp.pop %v93
    %v106 = vrcp.pop %v94
    %v107 = vrcp.pop %v95
    %v108 = vrcp.pop %v96
    %v109 = vmul.f32 %v101, %v105
    %v110 = vmul.f32 %v102, %v106
    %v111 = vmul.f32 %v103, %v107
    %v112 = vmul.f32 %v104, %v108
    %v113 = vand.u32 2147483647, %v109
    %v114 = vand.u32 2147483647, %v110
    %v115 = vand.u32 2147483647, %v111
    %v116 = vand.u32 2147483647, %v112
    %v117 = vsel %vm85, %v113, 0.0
    %v118 = vsel %vm86, %v114, 0.0
    %v119 = vsel %vm87, %v115, 0.0
    %v120 = vsel %vm88, %v116, 0.0
    %v121 = vsel %vm85, 1, 0
    %v122 = vsel %vm86, 1, 0
    %v123 = vsel %vm87, 1, 0
    %v124 = vsel %vm88, 1, 0
    %v125 = vcvt.s32.f32 %v121
    %v126 = vcvt.s32.f32 %v122
    %v127 = vcvt.s32.f32 %v123
    %v128 = vcvt.s32.f32 %v124
    %v129 = vld [vmem:[%s3] sm:$0xff]
    %v130 = vadd.f32 %v117, %v118
    %v131 = vadd.f32 %v130, %v119
    %v132 = vadd.f32 %v131, %v120
    %133 = vadd.xlane.f32.xlu0 %v132
    %v134 = vpop.xlane.xlu0 %133
    %v135 = vadd.f32 %v129, %v134
    %vm136 = vcmask 7168
    %137 = vst.msk [vmem:[%s3] sm:$0xff] %vm136, %v135
    %v138 = vld [vmem:[%s4] sm:$0xff]
    %v139 = vadd.f32 %v125, %v126
    %v140 = vadd.f32 %v139, %v127
    %v141 = vadd.f32 %v140, %v128
    %142 = vadd.xlane.f32.xlu0 %v141
    %v143 = vpop.xlane.xlu0 %142
    %v144 = vadd.f32 %v138, %v143
    %145 = vst.msk [vmem:[%s4] sm:$0xff] %vm136, %v144
    // Predicated region
    $region30: #{tpu_custom_call.1} parent=1 // pred_check
      _
    $region31: #{tpu_custom_call.1} parent=1 // pred_check_branch
      %147 = sbr.rel (0) target = $region33
    $region32: #{tpu_custom_call.1} parent=1 // pred_region
      _
    $region33: #{tpu_custom_call.1} parent=1 // pred_fallthru
      _
    // Predicated region
    $region34: #{tpu_custom_call.1} parent=1 // pred_check
      _
    $region35: #{tpu_custom_call.1} parent=1 // pred_check_branch
      %149 = sbr.rel (0) target = $region37
    $region36: #{tpu_custom_call.1} parent=1 // pred_region
      _
    $region37: #{tpu_custom_call.1} parent=1 // pred_fallthru
      _
    // Predicated region
    $region38: #{tpu_custom_call.1} parent=1 // pred_check
      _
    $region39: #{tpu_custom_call.1} parent=1 // pred_check_branch
      %151 = sbr.rel (0) target = $region41
    $region40: #{tpu_custom_call.1} parent=1 // pred_region
      _
    $region41: #{tpu_custom_call.1} parent=1 // pred_fallthru
      _
    // Predicated region
    $region42: #{tpu_custom_call.1} parent=1 // pred_check
      _
    $region43: #{tpu_custom_call.1} parent=1 // pred_check_branch
      %153 = sbr.rel (0) target = $region45
    $region44: #{tpu_custom_call.1} parent=1 // pred_region
      _
    $region45: #{tpu_custom_call.1} parent=1 // pred_fallthru
      _
    %154 = vsyncpa [#allocation3], 1
    %155 = vsyncpa [#allocation5], 1

</llo_original>
